<compile_context>
chip_gen: v7x
topology: tpu7x:2x2x1
jax: 0.10.0
libtpu: 0.0.40
codegen_flags: <defaults>
</compile_context>

<pallas_src>
import functools

import jax
import jax.numpy as jnp
from jax.experimental import pallas as pl
from jax.experimental.pallas import tpu as pltpu


def _round_up(x, m):
    return ((x + m - 1) // m) * m


def _spoc_kernel_single(x_ref, o_ref, *, inv_n):
    """Whole reduction axis resident in VMEM: one reduce + scale per row block."""
    s = jnp.sum(x_ref[...].astype(jnp.float32), axis=-1, keepdims=True)
    o_ref[...] = (s * inv_n).astype(o_ref.dtype)


def _spoc_kernel_tiled(x_ref, o_ref, acc_ref, *, inv_n, rem):
    """Streaming mean over the lane axis, N tiled along the last grid axis.

    x_ref:   (TR, TN) input tile (rows on sublanes, points on lanes)
    o_ref:   (TR, 1)  output tile, resident across the N grid axis
    acc_ref: (TR, 1)  f32 running sum
    rem:     static count of valid lanes in the LAST N tile (0 => tile is full)
    """
    n = pl.program_id(1)
    last = pl.num_programs(1) - 1

    @pl.when(n == 0)
    def _():
        acc_ref[...] = jnp.zeros_like(acc_ref)

    x = x_ref[...].astype(jnp.float32)

    if rem:
        # Ragged tail: lanes >= rem of the last tile hold unspecified data
        # (the block DMA is clamped to the array bounds) -> mask them out.
        @pl.when(n != last)
        def _():
            acc_ref[...] += jnp.sum(x, axis=-1, keepdims=True)

        @pl.when(n == last)
        def _():
            lane = jax.lax.broadcasted_iota(jnp.int32, x.shape, 1)
            xm = jnp.where(lane < rem, x, 0.0)
            acc_ref[...] += jnp.sum(xm, axis=-1, keepdims=True)
    else:
        acc_ref[...] += jnp.sum(x, axis=-1, keepdims=True)

    @pl.when(n == last)
    def _():
        o_ref[...] = (acc_ref[...] * inv_n).astype(o_ref.dtype)


def spoc(x, *, tile_rows=None, tile_n=None, vmem_budget_bytes=32 * 1024 * 1024):
    """SPoC pooling: mean over the last axis of (..., N) -> (...).

    No HBM-side padding: ragged shapes are handled by an in-kernel lane mask
    (last N tile) and by Pallas' clamped block DMA (last row block).
    """
    *lead, N = x.shape
    R = 1
    for d in lead:
        R *= d
    xr = x.reshape(R, N)

    dtype_bytes = jnp.dtype(x.dtype).itemsize
    # Sublane packing multiple: 8 for 4-byte, 16 for 2-byte, 32 for 1-byte dtypes.
    sub = max(8, 32 // dtype_bytes)

    # Clamp the double-buffered input budget to a v7x-safe footprint
    # (v7x has 64 MiB physical VMEM per TensorCore).
    vmem_budget_bytes = min(int(vmem_budget_bytes), 40 * 1024 * 1024)

    # ---- row tile: aim for >= 4 row blocks (v7x megacore), cap at 256 rows --
    if tile_rows is None:
        tile_rows = min(256, _round_up(pl.cdiv(R, 4), sub))
    tile_rows = max(sub, _round_up(int(tile_rows), sub))
    tile_rows = min(tile_rows, _round_up(R, sub), 1024)

    n_lanes = _round_up(N, 128)          # lane footprint of a full row in VMEM
    row_blocks = pl.cdiv(R, tile_rows)
    inv_n = 1.0 / float(N)
    out_shape = jax.ShapeDtypeStruct((R, 1), x.dtype)

    # ---- fast path: whole reduction axis fits the budget ---------------------
    if tile_n is None and 2 * tile_rows * n_lanes * dtype_bytes <= vmem_budget_bytes:
        need = 2 * tile_rows * n_lanes * dtype_bytes
        vmem_limit = min(max(need + (4 << 20), 16 << 20), 48 << 20)
        out = pl.pallas_call(
            functools.partial(_spoc_kernel_single, inv_n=inv_n),
            out_shape=out_shape,
            grid_spec=pltpu.PrefetchScalarGridSpec(
                num_scalar_prefetch=0,
                grid=(row_blocks,),
                in_specs=[pl.BlockSpec((tile_rows, N), lambda r: (r, 0))],
                out_specs=pl.BlockSpec((tile_rows, 1), lambda r: (r, 0)),
            ),
            compiler_params=pltpu.CompilerParams(
                dimension_semantics=("parallel",),
                vmem_limit_bytes=int(vmem_limit),
            ),
        )(xr)
        return out[:, 0].reshape(*lead)

    # ---- tiled path: stream N through a (TR, 1) f32 accumulator --------------
    max_tn = max(128, (vmem_budget_bytes // (2 * tile_rows * dtype_bytes)) // 128 * 128)
    if tile_n is None:
        tile_n = max_tn
    tile_n = max(128, _round_up(int(tile_n), 128))
    tile_n = min(tile_n, max_tn, n_lanes)   # clamp user values to the budget

    n_blocks = pl.cdiv(N, tile_n)
    rem = N % tile_n                         # valid lanes in the last N tile
    need = 2 * tile_rows * tile_n * dtype_bytes
    vmem_limit = min(max(need + (4 << 20), 16 << 20), 48 << 20)

    out = pl.pallas_call(
        functools.partial(_spoc_kernel_tiled, inv_n=inv_n, rem=rem),
        out_shape=out_shape,
        grid_spec=pltpu.PrefetchScalarGridSpec(
            num_scalar_prefetch=0,
            grid=(row_blocks, n_blocks),
            in_specs=[pl.BlockSpec((tile_rows, tile_n), lambda r, n: (r, n))],
            out_specs=pl.BlockSpec((tile_rows, 1), lambda r, n: (r, 0)),
            scratch_shapes=[pltpu.VMEM((tile_rows, 1), jnp.float32)],
        ),
        compiler_params=pltpu.CompilerParams(
            dimension_semantics=("parallel", "arbitrary"),
            vmem_limit_bytes=int(vmem_limit),
        ),
    )(xr)
    return out[:, 0].reshape(*lead)


if __name__ == "__main__":
    # SPoC has no parameters; only the input matters.
    key = jax.random.PRNGKey(0)

    # Small TransLoc3D-like shape: (batch, channels, num_points) -> fast path.
    B, C, N = 2, 8, 256
    x = jax.random.normal(key, (B, C, N), dtype=jnp.float32)
    out = jax.block_until_ready(spoc(x))
    ref = jnp.mean(x, axis=-1)
    assert out.shape == (B, C), out.shape
    assert jnp.allclose(out, ref, atol=1e-5, rtol=1e-5), "mismatch vs reference"

    # Ragged rows + ragged N, forced onto the tiled streaming path so the
    # in-kernel lane mask and the (TR, 1) accumulator are exercised.
    x2 = jax.random.normal(jax.random.PRNGKey(1), (3, 5, 300), dtype=jnp.float32)
    out2 = jax.block_until_ready(spoc(x2, tile_n=128))
    ref2 = jnp.mean(x2, axis=-1)
    assert out2.shape == (3, 5), out2.shape
    assert jnp.allclose(out2, ref2, atol=1e-5, rtol=1e-5), "mismatch vs reference (tiled)"

    # bf16 input exercises the 16-row sublane-packing rounding.
    x3 = jax.random.normal(jax.random.PRNGKey(2), (2, 16, 384), dtype=jnp.bfloat16)
    out3 = jax.block_until_ready(spoc(x3))
    ref3 = jnp.mean(x3.astype(jnp.float32), axis=-1)
    assert out3.shape == (2, 16), out3.shape
    assert jnp.allclose(out3.astype(jnp.float32), ref3, atol=2e-2, rtol=2e-2), \
        "mismatch vs reference (bf16)"

    print("KERNEL_OK")
</pallas_src>

<mosaic_0001>
module attributes {stable_mosaic.version = 11 : i64} {
  func.func @_spoc_kernel_single(%arg0: i32, %arg1: memref<8x256xf32, #tpu.memory_space<vmem>>, %arg2: memref<8x1xf32, #tpu.memory_space<vmem>>) attributes {dimension_semantics = [#tpu.dimension_semantics<parallel>], iteration_bounds = array<i64: 2>, scalar_prefetch = 0 : i64, scratch_operands = 0 : i64, tpu.core_type = #tpu.core_type<tc>, window_params = [{transform_indices = @transform_0, window_bounds = array<i64: 8, 256>}, {transform_indices = @transform_1, window_bounds = array<i64: 8, 1>}]} {
    %c0 = arith.constant 0 : index
    %c0_0 = arith.constant 0 : index
    %0 = vector.load %arg1[%c0, %c0_0] : memref<8x256xf32, #tpu.memory_space<vmem>>, vector<8x256xf32>
    %cst = arith.constant dense<0.000000e+00> : vector<8xf32>
    %1 = vector.multi_reduction <add>, %0, %cst [1] : vector<8x256xf32> to vector<8xf32>
    %2 = vector.shape_cast %1 : vector<8xf32> to vector<8x1xf32>
    %cst_1 = arith.constant 3.906250e-03 : f32
    %3 = vector.broadcast %cst_1 : f32 to vector<8x1xf32>
    %4 = arith.mulf %2, %3 : vector<8x1xf32>
    %c0_2 = arith.constant 0 : index
    %c0_3 = arith.constant 0 : index
    %5 = vector.load %arg2[%c0_2, %c0_3] : memref<8x1xf32, #tpu.memory_space<vmem>>, vector<8x1xf32>
    tpu.vector_store %arg2[%c0_2, %c0_3], %4 {strides = array<i32>} : memref<8x1xf32, #tpu.memory_space<vmem>>, vector<8x1xf32>,
    return
  }
  func.func @transform_0(%arg0: i32) -> (i32, i32) {
    %c0_i32 = arith.constant 0 : i32
    %c0_i32_0 = arith.constant 0 : i32
    return %arg0, %c0_i32 : i32, i32
  }
  func.func @transform_1(%arg0: i32) -> (i32, i32) {
    %c0_i32 = arith.constant 0 : i32
    %c0_i32_0 = arith.constant 0 : i32
    return %arg0, %c0_i32 : i32, i32
  }
}

</mosaic_0001>

<llo_original>
// kernel: tpu_custom_call.1
$region0: #{tpu_custom_call.1}
  #allocation0 [shape = 'u32[]', space=smem, size = 0x4, offset = 0x4, fixed_abs, tag = 'smem constant byte address 0x4 - core index']
  #allocation1 [shape = 'u32[144,128]{1,0:T(1,128)}', space=vmem, size = 0x12000, scoped, tag = 'internal scratch']
  %s0 = inlined_call_operand.hbm [shape: f32[16,256], index: 0, kind: input, shape index: {}]
  %s1 = inlined_call_operand.vmem [shape: f32[16,1], index: 1, kind: output, shape index: {}]
  %s2 = sld [smem:[#allocation0]]
  $region41: #{tpu_custom_call.1} parent=0
    _
  %s4 = ssub.s32 1, %s2
  %s5 = scalar_select 0, %s4, %s2
  $region1: #{tpu_custom_call.1} parent=0
    #allocation2 [shape = 'u8[16384]{0}', space=vmem, size = 0x4000, scoped, tag = 'input window, operand 0']
    #allocation3 [shape = 's32[2]{0}', space=sflag, size = 0x8, scoped, tag = 'scoped memory for tpu_custom_call.1']
    %6 = vsyncpa [#allocation3], 0
    %s7 = scalar_lea.sflag [#allocation3], 1
    %8 = vsyncpa %s7, 0
    loop: start=0, step=1, limit=4
    $region2: #{tpu_custom_call.1} parent=1 // loop_pre_header
      _
    $region3: #{tpu_custom_call.1} parent=1 // loop_header
      %s10 = sphi 0, %s14
      %p11 = scmp.ge.s32.totalorder %s10, 4
      %s20 = sphi 0, %s22
      %s23 = sphi 0, %s20
      %s24 = sphi 0, %s23
      %s40 = sphi 0, %s24
      %s46 = sphi 0, %s48
      %s49 = sphi 0, %s46
      %s50 = sphi 0, %s49
      %s66 = sphi 0, %s50
    $region4: #{tpu_custom_call.1} parent=1 // loop_header_branch
      %13 = sbr.rel (%p11) target = $region8
    $region5: #{tpu_custom_call.1} parent=1 // loop_body
      %s15 = ssub.s32 %s10, 1
      %s16 = ssub.s32 %s10, 2
      %s17 = sadd.s32 %s10, 1
      %s18 = ssub.s32 %s10, %s17
      %p19 = scmp.eq.s32.totalorder %s18, 0
      %s21 = sadd.s32 %s20, 1
      %s22 = scalar_select %p19, %s20, %s21
      %p25 = pneg %p19
      %p26 = scmp.eq.s32.totalorder %s10, 1
      %p27 = por %p25, %p26
      %p28 = scmp.ne.s32.totalorder %s20, %s23
      %p29 = scmp.eq.s32.totalorder %s10, 0
      %p30 = por %p28, %p29
      %p31 = scmp.ne.s32.totalorder %s20, %s23
      %p32 = scmp.eq.s32.totalorder %s15, 1
      %p33 = por %p31, %p32
      %p34 = scmp.ne.s32.totalorder %s23, %s24
      %p35 = scmp.eq.s32.totalorder %s15, 0
      %p36 = por %p34, %p35
      %p37 = scmp.ne.s32.totalorder %s23, %s24
      %p38 = scmp.eq.s32.totalorder %s16, 1
      %p39 = por %p37, %p38
      %p41 = scmp.ne.s32.totalorder %s24, %s40
      %p42 = scmp.eq.s32.totalorder %s16, 0
      %p43 = por %p41, %p42
      %s44 = ssub.s32 %s10, %s17
      %p45 = scmp.eq.s32.totalorder %s44, 0
      %s47 = sadd.s32 %s46, 1
      %s48 = scalar_select %p45, %s46, %s47
      %p51 = pneg %p45
      %p52 = scmp.eq.s32.totalorder %s10, 1
      %p53 = por %p51, %p52
      %p54 = scmp.ne.s32.totalorder %s46, %s49
      %p55 = scmp.eq.s32.totalorder %s10, 0
      %p56 = por %p54, %p55
      %p57 = scmp.ne.s32.totalorder %s46, %s49
      %p58 = scmp.eq.s32.totalorder %s15, 1
      %p59 = por %p57, %p58
      %p60 = scmp.ne.s32.totalorder %s49, %s50
      %p61 = scmp.eq.s32.totalorder %s15, 0
      %p62 = por %p60, %p61
      %p63 = scmp.ne.s32.totalorder %s49, %s50
      %p64 = scmp.eq.s32.totalorder %s16, 1
      %p65 = por %p63, %p64
      %p67 = scmp.ne.s32.totalorder %s50, %s66
      %p68 = scmp.eq.s32.totalorder %s16, 0
      %p69 = por %p67, %p68
      %p70 = scmp.le.s32.totalorder 1, %s10
      %p71 = scmp.lt.s32.totalorder %s10, 3
      %p72 = pnand %p70, %p71
      %p73 = pneg %p72
      // Predicated region
      $region9: #{tpu_custom_call.1} parent=5 // pred_check
        _
      $region10: #{tpu_custom_call.1} parent=5 // pred_check_branch
        %75 = sbr.rel (%p72) target = $region12
      $region11: #{tpu_custom_call.1} parent=5 // pred_region
        %s76 = ssub.s32 %s10, 1
      $region12: #{tpu_custom_call.1} parent=5 // pred_fallthru
        _
      %p77 = scmp.lt.s32.totalorder %s10, 2
      // Predicated region
      $region13: #{tpu_custom_call.1} parent=5 // pred_check
        %p78 = pneg %p77
      $region14: #{tpu_custom_call.1} parent=5 // pred_check_branch
        %80 = sbr.rel (%p78) target = $region16
      $region15: #{tpu_custom_call.1} parent=5 // pred_region
        // Predicated region
        $region17: #{tpu_custom_call.1} parent=15 // pred_check
          %p81 = pneg %p30
        $region18: #{tpu_custom_call.1} parent=15 // pred_check_branch
          %83 = sbr.rel (%p81) target = $region20
        $region19: #{tpu_custom_call.1} parent=15 // pred_region
          %s84 = sand.u32 %s20, 1
          %s85 = scalar_lea.sflag [#allocation3], %s84
          %s86 = sand.u32 %s20, 1
          %s87 = smul.addr %s86, 16
          %s88 = scalar_lea.vmem [#allocation2], %s87
          %s90 = ssub.s32 256, 256
          %91 = vsyncadd %s85, %s90
          %s92 = smul.addr %s10, 2
          %s93 = smul.addr %s92, 128
          %s94 = scalar_lea.hbm %s0, %s93
          %s96 = sshll.u32 %s88, 4
          %s97 = int_to_ptr.vmem [resolvable:$true] %s96
          %99 = dma.hbm_to_vmem [thread:$0]  %s94, 256, %s97, %s85
        $region20: #{tpu_custom_call.1} parent=15 // pred_fallthru
          _
      $region16: #{tpu_custom_call.1} parent=5 // pred_fallthru
        _
      %p100 = scmp.le.s32.totalorder 1, %s10
      %p101 = scmp.lt.s32.totalorder %s10, 3
      %p102 = pnand %p100, %p101
      %p103 = pneg %p102
      // Predicated region
      $region21: #{tpu_custom_call.1} parent=5 // pred_check
        _
      $region22: #{tpu_custom_call.1} parent=5 // pred_check_branch
        %105 = sbr.rel (%p102) target = $region24
      $region23: #{tpu_custom_call.1} parent=5 // pred_region
        %s106 = ssub.s32 %s10, 1
        %s107 = sand.u32 %s23, 1
        %s108 = scalar_lea.sflag [#allocation3], %s107
        %s109 = sand.u32 %s23, 1
        %s110 = smul.addr %s109, 16
        %s111 = scalar_lea.vmem [#allocation2], %s110
        // Predicated region
        $region25: #{tpu_custom_call.1} parent=23 // pred_check
          %p112 = pneg %p36
        $region26: #{tpu_custom_call.1} parent=23 // pred_check_branch
          %114 = sbr.rel (%p112) target = $region28
        $region27: #{tpu_custom_call.1} parent=23 // pred_region
          %115 = dma.done %s108, 256
        $region28: #{tpu_custom_call.1} parent=23 // pred_fallthru
          _
        %s116 = sand.u32 %s23, 1
        %s117 = scalar_lea.sflag [#allocation3], %s116
        %s118 = sand.u32 %s23, 1
        %s119 = smul.addr %s118, 16
        %s120 = scalar_lea.vmem [#allocation2], %s119
        %p121 = pneg %p36
        %p122 = pneg %p33
        %p123 = pneg %p62
        %p124 = pneg %p59
        %p125 = scmp.lt.s32.totalorder %s15, 1
        %s126 = scalar_select %p125, %s15, 1
        %s127 = smul.addr %s126, 8
        %s128 = scalar_lea.vmem %s1, %s127
        %p129 = scmp.lt.s32.totalorder %s15, 1
        %s130 = scalar_select %p129, %s15, 1
        %s131 = smul.addr %s130, 8
        %s132 = scalar_lea.vmem %s1, %s131
        %v133 = vld [vmem:[%s111] sm:$0xff]
        %v134 = vld [vmem:[%s111 + $0x8] sm:$0xff]
        %v135 = vadd.f32 %v133, %v134
        %136 = vadd.xlane.f32.xlu0 %v135
        %v137 = vpop.xlane.xlu0 %136
        %v138 = vmul.f32 %v137, 0.00390625
        %vm139 = vcmask 7168
        %140 = vst.msk [vmem:[%s132] sm:$0xff] %vm139, %v138
        %p141 = scmp.lt.s32.totalorder %s15, 1
        %s142 = scalar_select %p141, %s15, 1
        %s143 = smul.addr %s142, 8
        %s144 = scalar_lea.vmem %s1, %s143
        // Predicated region
        $region29: #{tpu_custom_call.1} parent=23 // pred_check
          %p145 = pneg %p59
        $region30: #{tpu_custom_call.1} parent=23 // pred_check_branch
          %147 = sbr.rel (%p145) target = $region32
        $region31: #{tpu_custom_call.1} parent=23 // pred_region
          _
        $region32: #{tpu_custom_call.1} parent=23 // pred_fallthru
          _
      $region24: #{tpu_custom_call.1} parent=5 // pred_fallthru
        _
      %p148 = scmp.le.s32.totalorder 2, %s10
      // Predicated region
      $region33: #{tpu_custom_call.1} parent=5 // pred_check
        %p149 = pneg %p148
      $region34: #{tpu_custom_call.1} parent=5 // pred_check_branch
        %151 = sbr.rel (%p149) target = $region36
      $region35: #{tpu_custom_call.1} parent=5 // pred_region
        %s152 = ssub.s32 %s10, 2
        // Predicated region
        $region37: #{tpu_custom_call.1} parent=35 // pred_check
          %p153 = pneg %p65
        $region38: #{tpu_custom_call.1} parent=35 // pred_check_branch
          %155 = sbr.rel (%p153) target = $region40
        $region39: #{tpu_custom_call.1} parent=35 // pred_region
          %p156 = scmp.lt.s32.totalorder %s16, 1
          %s157 = scalar_select %p156, %s16, 1
          %s158 = smul.addr %s157, 8
          %s159 = scalar_lea.vmem %s1, %s158
        $region40: #{tpu_custom_call.1} parent=35 // pred_fallthru
          _
      $region36: #{tpu_custom_call.1} parent=5 // pred_fallthru
        _
    $region6: #{tpu_custom_call.1} parent=1 // loop_footer
      %s14 = sadd.s32 1, %s10
    $region7: #{tpu_custom_call.1} parent=1 // loop_footer_branch
      %9 = sbr.rel target = $region3
    $region8: #{tpu_custom_call.1} parent=1 // loop_exit
      _
    %160 = vsyncpa [#allocation3], 1
    %s161 = scalar_lea.sflag [#allocation3], 1
    %162 = vsyncpa %s161, 1

</llo_original>
